<compile_context>
chip_gen: v5e
topology: v5e:2x2
jax: 0.10.0
libtpu: 0.0.40
codegen_flags: <defaults>
</compile_context>

<pallas_src>
import jax
import jax.numpy as jnp
from jax.experimental import pallas as pl
from jax.experimental.pallas import tpu as pltpu


def _round_up(x: int, m: int) -> int:
    return ((x + m - 1) // m) * m


def freq_bias(sbj_labels, obj_labels, emb_table, num_node_classes, *, block_rows=1024):
    """Pallas equivalent of FreqBias.forward (embedding gather on flat pair index)."""
    orig_shape = sbj_labels.shape
    sbj = sbj_labels.reshape(-1).astype(jnp.int32)
    obj = obj_labels.reshape(-1).astype(jnp.int32)
    idx = sbj * num_node_classes + obj          # [N] flat table-row index
    n = idx.shape[0]
    cc, r = emb_table.shape

    # Row tile: multiple of 8, as large as block_rows, but small enough that the
    # grid has >= 2 steps when N allows (lets the "parallel" axis shard across
    # v7x's two TensorCores; no-op on v5e/v6e).
    n_eff = max(n, 1)
    tb = min(block_rows, _round_up(-(-n_eff // 2), 8))
    tb = max(tb, 8)
    n_pad = _round_up(n_eff, tb)
    idx_p = jnp.pad(idx, (0, n_pad - n)).reshape(n_pad, 1)

    grid = (n_pad // tb,)

    def kernel(idx_ref, emb_ref, out_ref):
        # idx_ref: (tb, 1) int32; emb_ref: (cc, r) resident table; out_ref: (tb, r).
        idx_blk = idx_ref[...]                                        # (tb, 1)
        cols = jax.lax.broadcasted_iota(jnp.int32, (1, cc), 1)        # (1, cc)
        onehot = (cols == idx_blk).astype(emb_ref.dtype)              # (tb, cc)
        out_ref[...] = jnp.dot(
            onehot, emb_ref[...], preferred_element_type=jnp.float32
        ).astype(out_ref.dtype)

    # Explicit VMEM budget: table (single-buffered) + double-buffered output
    # slab + double-buffered index block, with headroom.
    itemsize = jnp.dtype(emb_table.dtype).itemsize
    needed = cc * r * itemsize + 2 * tb * r * itemsize + 2 * tb * 4 + tb * cc * 4
    vmem_limit = max(int(needed * 1.25) + (1 << 20), 32 << 20)
    vmem_limit = min(vmem_limit, 100 << 20)

    out = pl.pallas_call(
        kernel,
        out_shape=jax.ShapeDtypeStruct((n_pad, r), emb_table.dtype),
        grid_spec=pltpu.PrefetchScalarGridSpec(
            num_scalar_prefetch=0,
            grid=grid,
            in_specs=[
                # Index block: (tb, 1); last dim is full extent -> (8,128)-exempt.
                pl.BlockSpec((tb, 1), lambda i: (i, 0)),
                # Full resident table, constant index_map, single-buffered.
                pl.BlockSpec((cc, r), lambda i: (0, 0),
                             pipeline_mode=pl.Buffered(1)),
            ],
            out_specs=pl.BlockSpec((tb, r), lambda i: (i, 0)),
        ),
        compiler_params=pltpu.CompilerParams(
            dimension_semantics=("parallel",),
            vmem_limit_bytes=vmem_limit,
        ),
    )(idx_p, emb_table)

    if n_pad != n:
        out = out[:n]
    return out.reshape(orig_shape + (r,))


if __name__ == "__main__":
    num_node_classes = 10     # C
    num_rel_outputs = 128     # R

    key = jax.random.PRNGKey(0)
    k_emb, k_sbj, k_obj = jax.random.split(key, 3)

    # Deterministic "embedding" parameter: [C*C, R] float32 (same as nn.Embedding weight).
    emb_table = jax.random.normal(
        k_emb, (num_node_classes * num_node_classes, num_rel_outputs),
        dtype=jnp.float32)

    # Labels: a small batch of (subject, object) class ids, shape (2, 4).
    sbj_labels = jax.random.randint(k_sbj, (2, 4), 0, num_node_classes, dtype=jnp.int32)
    obj_labels = jax.random.randint(k_obj, (2, 4), 0, num_node_classes, dtype=jnp.int32)

    out = freq_bias(sbj_labels, obj_labels, emb_table, num_node_classes)
    out = jax.block_until_ready(out)

    # Reference (plain JAX) check of the gather semantics.
    ref = jnp.take(emb_table,
                   sbj_labels * num_node_classes + obj_labels,
                   axis=0)
    assert out.shape == sbj_labels.shape + (num_rel_outputs,)
    assert jnp.allclose(out, ref), "mismatch vs reference gather"

    print("KERNEL_OK")
</pallas_src>

<mosaic_0001>
module attributes {stable_mosaic.version = 11 : i64} {
  func.func @kernel(%arg0: i32, %arg1: memref<8x1xi32, #tpu.memory_space<vmem>>, %arg2: memref<100x128xf32, #tpu.memory_space<vmem>>, %arg3: memref<8x128xf32, #tpu.memory_space<vmem>>) attributes {dimension_semantics = [#tpu.dimension_semantics<parallel>], iteration_bounds = array<i64: 1>, scalar_prefetch = 0 : i64, scratch_operands = 0 : i64, tpu.core_type = #tpu.core_type<tc>, window_params = [{transform_indices = @transform_0, window_bounds = array<i64: 8, 1>}, {pipeline_mode = #tpu.pipeline_mode<synchronous>, transform_indices = @transform_1, window_bounds = array<i64: 100, 128>}, {transform_indices = @transform_2, window_bounds = array<i64: 8, 128>}]} {
    %c0 = arith.constant 0 : index
    %c0_0 = arith.constant 0 : index
    %0 = vector.load %arg1[%c0, %c0_0] : memref<8x1xi32, #tpu.memory_space<vmem>>, vector<8x1xi32>
    %1 = tpu.iota {dimensions = array<i32: 1>} : vector<1x100xi32>
    %2 = vector.broadcast %1 : vector<1x100xi32> to vector<8x100xi32>
    %3 = vector.broadcast %0 : vector<8x1xi32> to vector<8x100xi32>
    %4 = arith.cmpi eq, %2, %3 : vector<8x100xi32>
    %5 = arith.extui %4 : vector<8x100xi1> to vector<8x100xi32>
    %6 = arith.sitofp %5 : vector<8x100xi32> to vector<8x100xf32>
    %c0_1 = arith.constant 0 : index
    %c0_2 = arith.constant 0 : index
    %7 = vector.load %arg2[%c0_1, %c0_2] : memref<100x128xf32, #tpu.memory_space<vmem>>, vector<100x128xf32>
    %cst = arith.constant dense<0.000000e+00> : vector<8x128xf32>
    %8 = tpu.matmul %6, %7, %cst {dimension_numbers = #tpu.dot_dimension_numbers<[1], [0], [0], [1], [0, 0, 1, 1], [], []>} : vector<8x100xf32>, vector<100x128xf32>, vector<8x128xf32> -> vector<8x128xf32>
    %c0_3 = arith.constant 0 : index
    %c0_4 = arith.constant 0 : index
    %9 = vector.load %arg3[%c0_3, %c0_4] : memref<8x128xf32, #tpu.memory_space<vmem>>, vector<8x128xf32>
    tpu.vector_store %arg3[%c0_3, %c0_4], %8 {strides = array<i32>} : memref<8x128xf32, #tpu.memory_space<vmem>>, vector<8x128xf32>,
    return
  }
  func.func @transform_0(%arg0: i32) -> (i32, i32) {
    %c0_i32 = arith.constant 0 : i32
    %c0_i32_0 = arith.constant 0 : i32
    return %arg0, %c0_i32 : i32, i32
  }
  func.func @transform_1(%arg0: i32) -> (i32, i32) {
    %c0_i32 = arith.constant 0 : i32
    %c0_i32_0 = arith.constant 0 : i32
    %c0_i32_1 = arith.constant 0 : i32
    return %c0_i32, %c0_i32_0 : i32, i32
  }
  func.func @transform_2(%arg0: i32) -> (i32, i32) {
    %c0_i32 = arith.constant 0 : i32
    %c0_i32_0 = arith.constant 0 : i32
    return %arg0, %c0_i32 : i32, i32
  }
}

</mosaic_0001>

<llo_original>
// kernel: tpu_custom_call.1
$region0: #{tpu_custom_call.1}
  #allocation0 [shape = 'u32[]', space=smem, size = 0x4, offset = 0x4, fixed_abs, tag = 'smem constant byte address 0x4 - core index']
  #allocation1 [shape = 'u32[72,128]{1,0:T(1,128)}', space=vmem, size = 0x9000, scoped, tag = 'internal scratch']
  %s0 = inlined_call_operand.vmem [shape: s32[8,1], index: 0, kind: input, shape index: {}]
  %s1 = inlined_call_operand.hbm [shape: f32[100,128], index: 1, kind: input, shape index: {}]
  %s2 = inlined_call_operand.hbm [shape: f32[8,128], index: 2, kind: output, shape index: {}]
  %s3 = sld [smem:[#allocation0]]
  $region22: #{tpu_custom_call.1} parent=0
    _
  %s5 = ssub.s32 1, %s3
  %s6 = scalar_select 0, %s5, %s3
  $region1: #{tpu_custom_call.1} parent=0
    #allocation2 [shape = 'u8[53248]{0}', space=vmem, size = 0xd000, scoped, tag = 'input window, operand 1, single buffered']
    #allocation3 [shape = 's32[1]{0}', space=sflag, size = 0x4, scoped, tag = 'scoped memory for tpu_custom_call.1']
    #allocation4 [shape = 's32[1]{0}', space=sflag, size = 0x4, scoped, tag = 'scoped memory for tpu_custom_call.1']
    #allocation5 [shape = 'u8[4096]{0}', space=vmem, size = 0x1000, scoped, tag = 'output window, operand 0, single buffered']
    %7 = vsyncpa [#allocation3], 0
    %8 = vsyncpa [#allocation4], 0
    // Predicated region
    $region2: #{tpu_custom_call.1} parent=1 // pred_check
      _
    $region3: #{tpu_custom_call.1} parent=1 // pred_check_branch
      %10 = sbr.rel (0) target = $region5
    $region4: #{tpu_custom_call.1} parent=1 // pred_region
      _
    $region5: #{tpu_custom_call.1} parent=1 // pred_fallthru
      _
    // Predicated region
    $region6: #{tpu_custom_call.1} parent=1 // pred_check
      _
    $region7: #{tpu_custom_call.1} parent=1 // pred_check_branch
      %12 = sbr.rel (0) target = $region9
    $region8: #{tpu_custom_call.1} parent=1 // pred_region
      %14 = vsyncadd [#allocation3], 0
      %s15 = sshll.u32 %s1, 4
      %s16 = int_to_ptr.hbm [resolvable:$true] %s15
      %s17 = sshll.u32 [#allocation2], 4
      %s18 = int_to_ptr.vmem [resolvable:$true] %s17
      %23 = dma.hbm_to_vmem [thread:$0]  %s16, 1664, %s18, [#allocation3], 128, 128, 8
    $region9: #{tpu_custom_call.1} parent=1 // pred_fallthru
      _
    // Predicated region
    $region10: #{tpu_custom_call.1} parent=1 // pred_check
      _
    $region11: #{tpu_custom_call.1} parent=1 // pred_check_branch
      %25 = sbr.rel (0) target = $region13
    $region12: #{tpu_custom_call.1} parent=1 // pred_region
      %27 = dma.done [#allocation3], 1664
    $region13: #{tpu_custom_call.1} parent=1 // pred_fallthru
      _
    %v28 = vld [vmem:[%s0] sm:$0xff]
    %v29 = vlaneseq
    %v30 = vand.u32 %v29, 127
    %31 = vset.pattern.permute.xlu0 0
    %32 = vperm.xlu0 %31, %v28
    %v33 = vpop.permute.xlu0 %32
    %vm34 = vcmp.eq.s32.totalorder %v30, %v33
    %v35 = vsel %vm34, 1, 0
    %v36 = vcvt.s32.f32 %v35
    %v37 = vld [vmem:[#allocation2] sm:$0xff]
    %v38 = vld [vmem:[#allocation2 + $0x8] sm:$0xff]
    %v39 = vld [vmem:[#allocation2 + $0x10] sm:$0xff]
    %v40 = vld [vmem:[#allocation2 + $0x18] sm:$0xff]
    %v41 = vld [vmem:[#allocation2 + $0x20] sm:$0xff]
    %v42 = vld [vmem:[#allocation2 + $0x28] sm:$0xff]
    %v43 = vld [vmem:[#allocation2 + $0x30] sm:$0xff]
    %v44 = vld [vmem:[#allocation2 + $0x38] sm:$0xff]
    %v45 = vld [vmem:[#allocation2 + $0x40] sm:$0xff]
    %v46 = vld [vmem:[#allocation2 + $0x48] sm:$0xff]
    %v47 = vld [vmem:[#allocation2 + $0x50] sm:$0xff]
    %v48 = vld [vmem:[#allocation2 + $0x58] sm:$0xff]
    %v49 = vld [vmem:[#allocation2 + $0x60] sm:$0xf]
    %vm50 = vcmask 818176
    %v52 = vsel %vm50, %v36, 0
    %vm54 = vcmask 1043456
    %v56 = vsel %vm54, %v49, 0
    %58 = vmatpush.msra.mxu0 0.0
    %59 = vmatpush.msra.mxu0 0.0
    %60 = vmatpush.msra.mxu0 0.0
    %61 = vmatpush.msra.mxu0 %v56
    %62 = vmatpush.msra.mxu0 %v48
    %63 = vmatpush.msra.mxu0 %v47
    %64 = vmatpush.msra.mxu0 %v46
    %65 = vmatpush.msra.mxu0 %v45
    %66 = vmatpush.msra.mxu0 %v44
    %67 = vmatpush.msra.mxu0 %v43
    %68 = vmatpush.msra.mxu0 %v42
    %69 = vmatpush.msra.mxu0 %v41
    %70 = vmatpush.msra.mxu0 %v40
    %71 = vmatpush.msra.mxu0 %v39
    %72 = vmatpush.msra.mxu0 %v38
    %73 = vmatpush.msra.mxu0 %v37
    %74 = vmatmul.f32.gmra.mxu0 %v52
    %v75 = vpop.f32.mrf.mxu0
    %v76 = vadd.f32 0.0, %v75
    %77 = vdwg.mxu0
    %78 = vst [vmem:[#allocation5] sm:$0xff] %v76
    // Predicated region
    $region14: #{tpu_custom_call.1} parent=1 // pred_check
      _
    $region15: #{tpu_custom_call.1} parent=1 // pred_check_branch
      %80 = sbr.rel (0) target = $region17
    $region16: #{tpu_custom_call.1} parent=1 // pred_region
      %82 = vsyncadd [#allocation4], 0
      %s84 = sshll.u32 [#allocation5], 4
      %s85 = int_to_ptr.vmem [resolvable:$true] %s84
      %s86 = sshll.u32 %s2, 4
      %s87 = int_to_ptr.hbm [resolvable:$true] %s86
      %89 = dma.vmem_to_hbm [thread:$0]  %s85, 128, %s87, [#allocation4]
    $region17: #{tpu_custom_call.1} parent=1 // pred_fallthru
      _
    // Predicated region
    $region18: #{tpu_custom_call.1} parent=1 // pred_check
      _
    $region19: #{tpu_custom_call.1} parent=1 // pred_check_branch
      %91 = sbr.rel (0) target = $region21
    $region20: #{tpu_custom_call.1} parent=1 // pred_region
      %93 = dma.done [#allocation4], 128
    $region21: #{tpu_custom_call.1} parent=1 // pred_fallthru
      _
    %94 = vsyncpa [#allocation3], 1
    %95 = vsyncpa [#allocation4], 1

</llo_original>
